<compile_context>
chip_gen: v6e
topology: v6e:2x2x1
jax: 0.10.0
libtpu: 0.0.40
codegen_flags: <defaults>
</compile_context>

<pallas_src>
import math
import functools

import jax
import jax.numpy as jnp
from jax.experimental import pallas as pl
from jax.experimental.pallas import tpu as pltpu


def _make_positional_encoding(embed_dim: int, max_seq_len: int, dtype=jnp.float32):
    """Deterministic sin/cos positional-encoding table, identical to the torch init."""
    position = jnp.arange(0, max_seq_len, dtype=jnp.float32)[:, None]            # (L, 1)
    div_term = jnp.exp(
        jnp.arange(0, embed_dim, 2, dtype=jnp.float32)
        * (-math.log(10000.0) / embed_dim)
    )                                                                             # (D/2,)
    angles = position * div_term                                                  # (L, D/2)
    pe = jnp.zeros((max_seq_len, embed_dim), dtype=jnp.float32)
    pe = pe.at[:, 0::2].set(jnp.sin(angles))
    pe = pe.at[:, 1::2].set(jnp.cos(angles))
    return pe.astype(dtype)                                                       # (L, D)


def _pos_enc_kernel(x_ref, pe_ref, o_ref, *, scale_factor):
    # x_ref, pe_ref, o_ref: (1, TM, C) blocks.  Compute in f32 (cost hidden
    # under the memory stall), single cast on store.
    x = x_ref[...].astype(jnp.float32)
    if scale_factor is not None:
        x = x * scale_factor
    o_ref[...] = (x + pe_ref[...].astype(jnp.float32)).astype(o_ref.dtype)
    # TODO(synk): training-mode dropout (p=0.1) not applied; inference semantics.


def _choose_row_tile(n_rows, n_cols, itemsize, sublane, block_bytes):
    """Largest row tile that is sublane-aligned and ~<= block_bytes per array."""
    tm = max(1, block_bytes // (n_cols * itemsize))
    tm = min(tm, n_rows)
    if tm < n_rows:                                  # must be a multiple of `sublane`
        tm = max(sublane, (tm // sublane) * sublane)
        if tm > n_rows:                              # n_rows < sublane: take full dim
            tm = n_rows
    return tm


def positional_encoding_forward(x, pe_table, *, scale=True, block_bytes=2 * 1024 * 1024):
    """x: (B, S, D); pe_table: (max_seq_len, D) with max_seq_len >= S."""
    B, S, D = x.shape
    scale_factor = float(math.sqrt(D)) if scale else None
    pe = pe_table[:S, :].astype(x.dtype)

    itemsize = jnp.dtype(x.dtype).itemsize
    sublane = {1: 32, 2: 16}.get(itemsize, 8)        # f32->8, bf16->16, int8->32
    L = S * D

    if L % 128 == 0:
        # Lane-dense presentation: fold (S, D) into rows of C (mult. of 128) columns.
        C = 512 if L % 512 == 0 else (256 if L % 256 == 0 else 128)
        R = L // C
        x_v = x.reshape(B, R, C)
        pe_v = pe.reshape(1, R, C)
    else:
        # Uncommon fallback: keep natural (B, S, D) layout and tile S.
        # Correct, but lane-masked stores if D < 128.
        C, R = D, S
        x_v = x
        pe_v = pe.reshape(1, S, D)

    TM = _choose_row_tile(R, C, itemsize, sublane, block_bytes)
    grid = (pl.cdiv(R, TM), B)   # rows outer, batch inner -> PE block re-used across batch

    kernel = functools.partial(_pos_enc_kernel, scale_factor=scale_factor)
    out = pl.pallas_call(
        kernel,
        out_shape=jax.ShapeDtypeStruct((B, R, C), x.dtype),
        grid_spec=pltpu.PrefetchScalarGridSpec(
            num_scalar_prefetch=0,
            grid=grid,
            in_specs=[
                pl.BlockSpec((1, TM, C), lambda r, b: (b, r, 0)),   # x row tile
                pl.BlockSpec((1, TM, C), lambda r, b: (0, r, 0)),   # PE (batch broadcast)
            ],
            out_specs=pl.BlockSpec((1, TM, C), lambda r, b: (b, r, 0)),
        ),
        compiler_params=pltpu.CompilerParams(
            dimension_semantics=("parallel", "parallel"),
            vmem_limit_bytes=32 * 1024 * 1024,
        ),
    )(x_v, pe_v)
    return out.reshape(B, S, D)


def positional_encoding_reference(x, pe_table, *, scale=True):
    B, S, D = x.shape
    y = x * math.sqrt(D) if scale else x
    return y + pe_table[None, :S, :].astype(x.dtype)


if __name__ == "__main__":
    # Case 1: module-consistent small shapes (batch=2, seq=8, embed_dim=32).
    B, S, D, MAXLEN = 2, 8, 32, 64
    x1 = jax.random.normal(jax.random.PRNGKey(0), (B, S, D), dtype=jnp.float32)
    pe1 = _make_positional_encoding(D, MAXLEN)
    o1 = jax.block_until_ready(positional_encoding_forward(x1, pe1, scale=True))
    r1 = positional_encoding_reference(x1, pe1, scale=True)
    assert o1.shape == (B, S, D)
    assert jnp.allclose(o1, r1, atol=1e-5, rtol=1e-5), "case1 mismatch vs reference"

    # Case 2: lane-dense row-tiled path with multiple row tiles and a partial
    # (masked) edge block, small forced block size to exercise the pipeline.
    B2, S2, D2 = 2, 72, 64
    x2 = jax.random.normal(jax.random.PRNGKey(1), (B2, S2, D2), dtype=jnp.float32)
    pe2 = _make_positional_encoding(D2, 128)
    o2 = jax.block_until_ready(
        positional_encoding_forward(x2, pe2, scale=True, block_bytes=16 * 1024))
    r2 = positional_encoding_reference(x2, pe2, scale=True)
    assert jnp.allclose(o2, r2, atol=1e-5, rtol=1e-5), "case2 mismatch vs reference"

    # Case 3: non-lane-aligned fallback path (S*D % 128 != 0).
    B3, S3, D3 = 2, 8, 20
    x3 = jax.random.normal(jax.random.PRNGKey(2), (B3, S3, D3), dtype=jnp.float32)
    pe3 = _make_positional_encoding(D3, 64)
    o3 = jax.block_until_ready(positional_encoding_forward(x3, pe3, scale=True))
    r3 = positional_encoding_reference(x3, pe3, scale=True)
    assert jnp.allclose(o3, r3, atol=1e-5, rtol=1e-5), "case3 mismatch vs reference"

    print("KERNEL_OK")
</pallas_src>

<mosaic_0001>
module attributes {stable_mosaic.version = 11 : i64} {
  func.func @_pos_enc_kernel(%arg0: i32, %arg1: i32, %arg2: memref<1x1x256xf32, #tpu.memory_space<vmem>>, %arg3: memref<1x1x256xf32, #tpu.memory_space<vmem>>, %arg4: memref<1x1x256xf32, #tpu.memory_space<vmem>>) attributes {dimension_semantics = [#tpu.dimension_semantics<parallel>, #tpu.dimension_semantics<parallel>], iteration_bounds = array<i64: 1, 2>, scalar_prefetch = 0 : i64, scratch_operands = 0 : i64, tpu.core_type = #tpu.core_type<tc>, window_params = [{transform_indices = @transform_0, window_bounds = array<i64: 1, 1, 256>}, {transform_indices = @transform_1, window_bounds = array<i64: 1, 1, 256>}, {transform_indices = @transform_2, window_bounds = array<i64: 1, 1, 256>}]} {
    %c0 = arith.constant 0 : index
    %c0_0 = arith.constant 0 : index
    %c0_1 = arith.constant 0 : index
    %0 = vector.load %arg2[%c0, %c0_0, %c0_1] : memref<1x1x256xf32, #tpu.memory_space<vmem>>, vector<1x1x256xf32>
    %cst = arith.constant 5.65685415 : f32
    %1 = vector.broadcast %cst : f32 to vector<1x1x256xf32>
    %2 = arith.mulf %0, %1 : vector<1x1x256xf32>
    %c0_2 = arith.constant 0 : index
    %c0_3 = arith.constant 0 : index
    %c0_4 = arith.constant 0 : index
    %3 = vector.load %arg3[%c0_2, %c0_3, %c0_4] : memref<1x1x256xf32, #tpu.memory_space<vmem>>, vector<1x1x256xf32>
    %4 = arith.addf %2, %3 : vector<1x1x256xf32>
    %c0_5 = arith.constant 0 : index
    %c0_6 = arith.constant 0 : index
    %c0_7 = arith.constant 0 : index
    %5 = vector.load %arg4[%c0_5, %c0_6, %c0_7] : memref<1x1x256xf32, #tpu.memory_space<vmem>>, vector<1x1x256xf32>
    tpu.vector_store %arg4[%c0_5, %c0_6, %c0_7], %4 {strides = array<i32>} : memref<1x1x256xf32, #tpu.memory_space<vmem>>, vector<1x1x256xf32>,
    return
  }
  func.func @transform_0(%arg0: i32, %arg1: i32) -> (i32, i32, i32) {
    %c0_i32 = arith.constant 0 : i32
    %c0_i32_0 = arith.constant 0 : i32
    return %arg1, %arg0, %c0_i32 : i32, i32, i32
  }
  func.func @transform_1(%arg0: i32, %arg1: i32) -> (i32, i32, i32) {
    %c0_i32 = arith.constant 0 : i32
    %c0_i32_0 = arith.constant 0 : i32
    %c0_i32_1 = arith.constant 0 : i32
    return %c0_i32, %arg0, %c0_i32_0 : i32, i32, i32
  }
  func.func @transform_2(%arg0: i32, %arg1: i32) -> (i32, i32, i32) {
    %c0_i32 = arith.constant 0 : i32
    %c0_i32_0 = arith.constant 0 : i32
    return %arg1, %arg0, %c0_i32 : i32, i32, i32
  }
}

</mosaic_0001>

<llo_original>
// kernel: tpu_custom_call.1
$region0: #{tpu_custom_call.1}
  #allocation0 [shape = 'u32[]', space=smem, size = 0x4, offset = 0x4, fixed_abs, tag = 'smem constant byte address 0x4 - core index']
  #allocation1 [shape = 'u32[144,128]{1,0:T(1,128)}', space=vmem, size = 0x12000, scoped, tag = 'internal scratch']
  %s0 = inlined_call_operand.hbm [shape: f32[2,1,256], index: 0, kind: input, shape index: {}]
  %s1 = inlined_call_operand.hbm [shape: f32[1,1,256], index: 1, kind: input, shape index: {}]
  %s2 = inlined_call_operand.hbm [shape: f32[2,1,256], index: 2, kind: output, shape index: {}]
  %s3 = sld [smem:[#allocation0]]
  $region49: #{tpu_custom_call.1} parent=0
    _
  %s5 = ssub.s32 1, %s3
  %s6 = scalar_select 0, %s5, %s3
  $region1: #{tpu_custom_call.1} parent=0
    #allocation2 [shape = 'u8[2048]{0}', space=vmem, size = 0x800, scoped, tag = 'input window, operand 0']
    #allocation3 [shape = 's32[2]{0}', space=sflag, size = 0x8, scoped, tag = 'scoped memory for tpu_custom_call.1']
    #allocation4 [shape = 's32[2]{0}', space=sflag, size = 0x8, scoped, tag = 'scoped memory for tpu_custom_call.1']
    #allocation5 [shape = 'u8[1024]{0}', space=vmem, size = 0x400, scoped, tag = 'input window, operand 1, single buffered']
    #allocation6 [shape = 's32[1]{0}', space=sflag, size = 0x4, scoped, tag = 'scoped memory for tpu_custom_call.1']
    #allocation7 [shape = 'u8[2048]{0}', space=vmem, size = 0x800, scoped, tag = 'output window, operand 0']
    %7 = vsyncpa [#allocation3], 0
    %s8 = scalar_lea.sflag [#allocation3], 1
    %9 = vsyncpa %s8, 0
    %10 = vsyncpa [#allocation6], 0
    %11 = vsyncpa [#allocation4], 0
    %s12 = scalar_lea.sflag [#allocation4], 1
    %13 = vsyncpa %s12, 0
    loop: start=0, step=1, limit=4
    $region2: #{tpu_custom_call.1} parent=1 // loop_pre_header
      _
    $region3: #{tpu_custom_call.1} parent=1 // loop_header
      %s15 = sphi 0, %s19
      %p16 = scmp.ge.s32.totalorder %s15, 4
      %s22 = sphi 0, %s34
      %s23 = sphi 0, %s30
      %s24 = sphi 0, %s22
      %s25 = sphi 0, %s23
      %s26 = sphi 0, %s24
      %s27 = sphi 0, %s25
      %s39 = sphi 0, %s41
      %s42 = sphi 0, %s39
      %s43 = sphi 0, %s42
      %s59 = sphi 0, %s43
      %s65 = sphi 0, %s67
      %s68 = sphi 0, %s65
      %s69 = sphi 0, %s68
      %s85 = sphi 0, %s69
      %s93 = sphi 0, %s95
      %s96 = sphi 0, %s93
      %s97 = sphi 0, %s96
      %s113 = sphi 0, %s97
    $region4: #{tpu_custom_call.1} parent=1 // loop_header_branch
      %18 = sbr.rel (%p16) target = $region8
    $region5: #{tpu_custom_call.1} parent=1 // loop_body
      %s20 = ssub.s32 %s15, 1
      %s21 = ssub.s32 %s15, 2
      %s28 = sadd.s32 1, %s23
      %p29 = scmp.ge.s32.totalorder %s28, 2
      %s30 = scalar_select %p29, 0, %s28
      %s31 = sadd.s32 1, %s22
      %s32 = scalar_select %p29, %s31, %s22
      %p33 = scmp.ge.s32.totalorder %s32, 1
      %s34 = scalar_select %p33, 0, %s32
      %s35 = ssub.s32 %s23, %s30
      %s36 = ssub.s32 %s22, %s34
      %s37 = sor.u32 %s35, %s36
      %p38 = scmp.eq.s32.totalorder %s37, 0
      %s40 = sadd.s32 %s39, 1
      %s41 = scalar_select %p38, %s39, %s40
      %p44 = pneg %p38
      %p45 = scmp.eq.s32.totalorder %s15, 1
      %p46 = por %p44, %p45
      %p47 = scmp.ne.s32.totalorder %s39, %s42
      %p48 = scmp.eq.s32.totalorder %s15, 0
      %p49 = por %p47, %p48
      %p50 = scmp.ne.s32.totalorder %s39, %s42
      %p51 = scmp.eq.s32.totalorder %s20, 1
      %p52 = por %p50, %p51
      %p53 = scmp.ne.s32.totalorder %s42, %s43
      %p54 = scmp.eq.s32.totalorder %s20, 0
      %p55 = por %p53, %p54
      %p56 = scmp.ne.s32.totalorder %s42, %s43
      %p57 = scmp.eq.s32.totalorder %s21, 1
      %p58 = por %p56, %p57
      %p60 = scmp.ne.s32.totalorder %s43, %s59
      %p61 = scmp.eq.s32.totalorder %s21, 0
      %p62 = por %p60, %p61
      %s63 = ssub.s32 %s22, %s34
      %p64 = scmp.eq.s32.totalorder %s63, 0
      %s66 = sadd.s32 %s65, 1
      %s67 = scalar_select %p64, %s65, %s66
      %p70 = pneg %p64
      %p71 = scmp.eq.s32.totalorder %s15, 1
      %p72 = por %p70, %p71
      %p73 = scmp.ne.s32.totalorder %s65, %s68
      %p74 = scmp.eq.s32.totalorder %s15, 0
      %p75 = por %p73, %p74
      %p76 = scmp.ne.s32.totalorder %s65, %s68
      %p77 = scmp.eq.s32.totalorder %s20, 1
      %p78 = por %p76, %p77
      %p79 = scmp.ne.s32.totalorder %s68, %s69
      %p80 = scmp.eq.s32.totalorder %s20, 0
      %p81 = por %p79, %p80
      %p82 = scmp.ne.s32.totalorder %s68, %s69
      %p83 = scmp.eq.s32.totalorder %s21, 1
      %p84 = por %p82, %p83
      %p86 = scmp.ne.s32.totalorder %s69, %s85
      %p87 = scmp.eq.s32.totalorder %s21, 0
      %p88 = por %p86, %p87
      %s89 = ssub.s32 %s23, %s30
      %s90 = ssub.s32 %s22, %s34
      %s91 = sor.u32 %s89, %s90
      %p92 = scmp.eq.s32.totalorder %s91, 0
      %s94 = sadd.s32 %s93, 1
      %s95 = scalar_select %p92, %s93, %s94
      %p98 = pneg %p92
      %p99 = scmp.eq.s32.totalorder %s15, 1
      %p100 = por %p98, %p99
      %p101 = scmp.ne.s32.totalorder %s93, %s96
      %p102 = scmp.eq.s32.totalorder %s15, 0
      %p103 = por %p101, %p102
      %p104 = scmp.ne.s32.totalorder %s93, %s96
      %p105 = scmp.eq.s32.totalorder %s20, 1
      %p106 = por %p104, %p105
      %p107 = scmp.ne.s32.totalorder %s96, %s97
      %p108 = scmp.eq.s32.totalorder %s20, 0
      %p109 = por %p107, %p108
      %p110 = scmp.ne.s32.totalorder %s96, %s97
      %p111 = scmp.eq.s32.totalorder %s21, 1
      %p112 = por %p110, %p111
      %p114 = scmp.ne.s32.totalorder %s97, %s113
      %p115 = scmp.eq.s32.totalorder %s21, 0
      %p116 = por %p114, %p115
      %p117 = scmp.le.s32.totalorder 1, %s15
      %p118 = scmp.lt.s32.totalorder %s15, 3
      %p119 = pnand %p117, %p118
      %p120 = pneg %p119
      // Predicated region
      $region9: #{tpu_custom_call.1} parent=5 // pred_check
        _
      $region10: #{tpu_custom_call.1} parent=5 // pred_check_branch
        %122 = sbr.rel (%p119) target = $region12
      $region11: #{tpu_custom_call.1} parent=5 // pred_region
        %s123 = ssub.s32 %s15, 1
        // Predicated region
        $region13: #{tpu_custom_call.1} parent=11 // pred_check
          %p124 = pneg %p81
        $region14: #{tpu_custom_call.1} parent=11 // pred_check_branch
          %126 = sbr.rel (%p124) target = $region16
        $region15: #{tpu_custom_call.1} parent=11 // pred_region
          %s128 = ssub.s32 32, 32
          %129 = vsyncadd [#allocation6], %s128
          %s130 = smul.addr %s24, 2
          %s131 = smul.addr %s130, 16
          %s132 = scalar_lea.hbm %s1, %s131
          %s134 = sshll.u32 [#allocation5], 4
          %s135 = int_to_ptr.vmem [resolvable:$true] %s134
          %137 = dma.hbm_to_vmem [thread:$0]  %s132, 32, %s135, [#allocation6]
        $region16: #{tpu_custom_call.1} parent=11 // pred_fallthru
          _
      $region12: #{tpu_custom_call.1} parent=5 // pred_fallthru
        _
      %p138 = scmp.lt.s32.totalorder %s15, 2
      // Predicated region
      $region17: #{tpu_custom_call.1} parent=5 // pred_check
        %p139 = pneg %p138
      $region18: #{tpu_custom_call.1} parent=5 // pred_check_branch
        %141 = sbr.rel (%p139) target = $region20
      $region19: #{tpu_custom_call.1} parent=5 // pred_region
        // Predicated region
        $region21: #{tpu_custom_call.1} parent=19 // pred_check
          %p142 = pneg %p49
        $region22: #{tpu_custom_call.1} parent=19 // pred_check_branch
          %144 = sbr.rel (%p142) target = $region24
        $region23: #{tpu_custom_call.1} parent=19 // pred_region
          %s145 = sand.u32 %s39, 1
          %s146 = scalar_lea.sflag [#allocation3], %s145
          %s147 = sand.u32 %s39, 1
          %s148 = smul.addr %s147, 2
          %s149 = scalar_lea.vmem [#allocation2], %s148
          %s151 = ssub.s32 32, 32
          %152 = vsyncadd %s146, %s151
          %s153 = smul.addr %s22, 2
          %s154 = smul.addr %s23, 2
          %s155 = sadd.s32 %s153, %s154
          %s156 = smul.addr %s155, 16
          %s157 = scalar_lea.hbm %s0, %s156
          %s159 = sshll.u32 %s149, 4
          %s160 = int_to_ptr.vmem [resolvable:$true] %s159
          %162 = dma.hbm_to_vmem [thread:$0]  %s157, 32, %s160, %s146
        $region24: #{tpu_custom_call.1} parent=19 // pred_fallthru
          _
      $region20: #{tpu_custom_call.1} parent=5 // pred_fallthru
        _
      %p163 = scmp.le.s32.totalorder 1, %s15
      %p164 = scmp.lt.s32.totalorder %s15, 3
      %p165 = pnand %p163, %p164
      %p166 = pneg %p165
      // Predicated region
      $region25: #{tpu_custom_call.1} parent=5 // pred_check
        _
      $region26: #{tpu_custom_call.1} parent=5 // pred_check_branch
        %168 = sbr.rel (%p165) target = $region28
      $region27: #{tpu_custom_call.1} parent=5 // pred_region
        %s169 = ssub.s32 %s15, 1
        %s170 = sand.u32 %s42, 1
        %s171 = scalar_lea.sflag [#allocation3], %s170
        %s172 = sand.u32 %s42, 1
        %s173 = smul.addr %s172, 2
        %s174 = scalar_lea.vmem [#allocation2], %s173
        // Predicated region
        $region29: #{tpu_custom_call.1} parent=27 // pred_check
          %p175 = pneg %p55
        $region30: #{tpu_custom_call.1} parent=27 // pred_check_branch
          %177 = sbr.rel (%p175) target = $region32
        $region31: #{tpu_custom_call.1} parent=27 // pred_region
          %178 = dma.done %s171, 32
        $region32: #{tpu_custom_call.1} parent=27 // pred_fallthru
          _
        // Predicated region
        $region33: #{tpu_custom_call.1} parent=27 // pred_check
          %p179 = pneg %p81
        $region34: #{tpu_custom_call.1} parent=27 // pred_check_branch
          %181 = sbr.rel (%p179) target = $region36
        $region35: #{tpu_custom_call.1} parent=27 // pred_region
          %182 = dma.done [#allocation6], 32
        $region36: #{tpu_custom_call.1} parent=27 // pred_fallthru
          _
        %s183 = sand.u32 %s42, 1
        %s184 = scalar_lea.sflag [#allocation3], %s183
        %s185 = sand.u32 %s42, 1
        %s186 = smul.addr %s185, 2
        %s187 = scalar_lea.vmem [#allocation2], %s186
        %p188 = pneg %p55
        %p189 = pneg %p52
        %p190 = pneg %p81
        %p191 = pneg %p78
        %p192 = pneg %p109
        %p193 = pneg %p106
        %s194 = sand.u32 %s96, 1
        %s195 = scalar_lea.sflag [#allocation4], %s194
        %s196 = sand.u32 %s96, 1
        %s197 = smul.addr %s196, 2
        %s198 = scalar_lea.vmem [#allocation7], %s197
        %v199 = vld [vmem:[%s174] sm:$0x3]
        %v200 = vmul.f32 %v199, 5.656854
        %v201 = vld [vmem:[#allocation5] sm:$0x3]
        %v202 = vadd.f32 %v200, %v201
        %v203 = vlaneseq
        %vm204 = vcmp.ge.s32.totalorder %v203, 0
        %vm205 = vcmp.lt.s32.totalorder %v203, 256
        %vm206 = vmand %vm204, %vm205
        %207 = vst.msk [vmem:[%s198] sm:$0x3] %vm206, %v202
        %s208 = sand.u32 %s96, 1
        %s209 = scalar_lea.sflag [#allocation4], %s208
        %s210 = sand.u32 %s96, 1
        %s211 = smul.addr %s210, 2
        %s212 = scalar_lea.vmem [#allocation7], %s211
        // Predicated region
        $region37: #{tpu_custom_call.1} parent=27 // pred_check
          %p213 = pneg %p106
        $region38: #{tpu_custom_call.1} parent=27 // pred_check_branch
          %215 = sbr.rel (%p213) target = $region40
        $region39: #{tpu_custom_call.1} parent=27 // pred_region
          %s217 = ssub.s32 32, 32
          %218 = vsyncadd %s209, %s217
          %s219 = smul.addr %s24, 2
          %s220 = smul.addr %s25, 2
          %s221 = sadd.s32 %s219, %s220
          %s222 = smul.addr %s221, 16
          %s223 = scalar_lea.hbm %s2, %s222
          %s225 = sshll.u32 %s212, 4
          %s226 = int_to_ptr.vmem [resolvable:$true] %s225
          %228 = dma.vmem_to_hbm [thread:$0]  %s226, 32, %s223, %s209
        $region40: #{tpu_custom_call.1} parent=27 // pred_fallthru
          _
      $region28: #{tpu_custom_call.1} parent=5 // pred_fallthru
        _
      %p229 = scmp.le.s32.totalorder 2, %s15
      // Predicated region
      $region41: #{tpu_custom_call.1} parent=5 // pred_check
        %p230 = pneg %p229
      $region42: #{tpu_custom_call.1} parent=5 // pred_check_branch
        %232 = sbr.rel (%p230) target = $region44
      $region43: #{tpu_custom_call.1} parent=5 // pred_region
        %s233 = ssub.s32 %s15, 2
        // Predicated region
        $region45: #{tpu_custom_call.1} parent=43 // pred_check
          %p234 = pneg %p112
        $region46: #{tpu_custom_call.1} parent=43 // pred_check_branch
          %236 = sbr.rel (%p234) target = $region48
        $region47: #{tpu_custom_call.1} parent=43 // pred_region
          %s237 = sand.u32 %s97, 1
          %s238 = scalar_lea.sflag [#allocation4], %s237
          %s239 = sand.u32 %s97, 1
          %s240 = smul.addr %s239, 2
          %s241 = scalar_lea.vmem [#allocation7], %s240
          %242 = dma.done %s238, 32
        $region48: #{tpu_custom_call.1} parent=43 // pred_fallthru
          _
      $region44: #{tpu_custom_call.1} parent=5 // pred_fallthru
        _
    $region6: #{tpu_custom_call.1} parent=1 // loop_footer
      %s19 = sadd.s32 1, %s15
    $region7: #{tpu_custom_call.1} parent=1 // loop_footer_branch
      %14 = sbr.rel target = $region3
    $region8: #{tpu_custom_call.1} parent=1 // loop_exit
      _
    %243 = vsyncpa [#allocation3], 1
    %s244 = scalar_lea.sflag [#allocation3], 1
    %245 = vsyncpa %s244, 1
    %246 = vsyncpa [#allocation6], 1
    %247 = vsyncpa [#allocation4], 1
    %s248 = scalar_lea.sflag [#allocation4], 1
    %249 = vsyncpa %s248, 1

</llo_original>
